<compile_context>
chip_gen: v7x
topology: tpu7x:2x2x1
jax: 0.10.0
libtpu: 0.0.40
codegen_flags: <defaults>
</compile_context>

<pallas_src>
import functools

import jax
import jax.numpy as jnp
from jax.experimental import pallas as pl
from jax.experimental.pallas import tpu as pltpu


def _round_up(x, m):
    return (x + m - 1) // m * m


# ----------------------------------------------------------------------------------
# kernel: one (time-tile, channels) block of one sequence
# ----------------------------------------------------------------------------------
def _locked_dropout_kernel(lens_ref, x_ref, m_ref, o_ref):
    b = pl.program_id(0)          # which sequence
    tb = pl.program_id(1)         # which time tile
    tT, Cp = x_ref.shape

    # PackedSequence semantics: time steps at/after the sequence length are inert.
    t_idx = jax.lax.broadcasted_iota(jnp.int32, (tT, Cp), 0) + tb * tT
    valid = t_idx < lens_ref[b]

    # LockedDropout: the (1, Cp) mask is shared across the whole time axis.
    o_ref[...] = jnp.where(valid, x_ref[...] * m_ref[...], 0.0)


# ----------------------------------------------------------------------------------
# wrapper
# ----------------------------------------------------------------------------------
def locked_dropout(x, lengths, *, drop_prob, key=None, training=True, block_t=512):
    """LockedDropout forward on padded sequences.

    x: (B, T, C) padded activations; lengths: (B,) valid lengths.
    Equivalent to pad_packed_sequence(LockedDropout(p)(pack_padded_sequence(x, lengths))).
    Eval mode or drop_prob == 0 is the identity (matching the PyTorch module).
    """
    if (not training) or drop_prob == 0.0:
        return x, lengths

    if key is None:
        key = jax.random.PRNGKey(0)

    x = x.astype(jnp.float32)
    B, T, C = x.shape
    Cp = _round_up(C, 128)                         # lane-dense channel dim
    tT = _round_up(min(block_t, max(T, 8)), 8)     # sublane-aligned time tile
    Tp = _round_up(T, tT)

    # ONE Bernoulli(1 - p) draw per (sequence, channel), scaled; tiny (B, 1, Cp)
    # array, negligible HBM traffic next to the (B, T, C) activations.
    keep = jax.random.bernoulli(key, 1.0 - drop_prob, (B, 1, Cp))
    mask = keep.astype(jnp.float32) * jnp.float32(1.0 / (1.0 - drop_prob))

    if (Tp, Cp) != (T, C):
        # only pads when shapes are not already (8,128)-aligned; no copy otherwise
        xp = jnp.zeros((B, Tp, Cp), jnp.float32).at[:, :T, :C].set(x)
    else:
        xp = x

    out = pl.pallas_call(
        _locked_dropout_kernel,
        out_shape=jax.ShapeDtypeStruct((B, Tp, Cp), jnp.float32),
        grid_spec=pltpu.PrefetchScalarGridSpec(
            num_scalar_prefetch=1,                 # lengths -> SMEM scalars
            grid=(B, Tp // tT),
            in_specs=[
                pl.BlockSpec((None, tT, Cp), lambda b, t, lens: (b, t, 0)),
                pl.BlockSpec((None, 1, Cp), lambda b, t, lens: (b, 0, 0)),
            ],
            out_specs=pl.BlockSpec((None, tT, Cp), lambda b, t, lens: (b, t, 0)),
        ),
        compiler_params=pltpu.CompilerParams(
            dimension_semantics=("parallel", "parallel"),
        ),
    )(lengths.astype(jnp.int32), xp, mask)

    return out[:, :T, :C], lengths


# ----------------------------------------------------------------------------------
if __name__ == "__main__":
    import numpy as np

    B, T, C = 2, 16, 32
    p = 0.25
    x = jax.random.normal(jax.random.PRNGKey(0), (B, T, C), jnp.float32)
    lengths = jnp.array([16, 11], jnp.int32)
    mask_key = jax.random.PRNGKey(7)

    # small time tile (8 rows) so each sequence spans 2 grid tiles -> exercises the
    # "identical mask across all time tiles of one sequence" property
    fwd = jax.jit(functools.partial(locked_dropout, drop_prob=p, key=mask_key,
                                    training=True, block_t=8))
    out, out_lens = fwd(x, lengths)
    out = jax.block_until_ready(out)
    out_lens = jax.block_until_ready(out_lens)

    # eval mode is identity
    out_eval, _ = locked_dropout(x, lengths, drop_prob=p, training=False)
    assert bool(jnp.all(out_eval == x))

    out_np = np.asarray(out)
    x_np = np.asarray(x)
    lens_np = np.asarray(lengths)
    scale = 1.0 / (1.0 - p)

    assert out_np.shape == (B, T, C)
    assert np.all(np.isfinite(out_np))
    for b in range(B):
        L = int(lens_np[b])
        # padded time steps are inert (PackedSequence semantics)
        assert np.all(out_np[b, L:, :] == 0.0)
        for c in range(C):
            o = out_np[b, :L, c]
            e = x_np[b, :L, c] * scale
            dropped = np.allclose(o, 0.0, atol=1e-6)
            kept = np.allclose(o, e, rtol=1e-5, atol=1e-6)
            # each (sequence, channel) is either entirely dropped or entirely kept
            # and scaled by 1/(1-p), constant over the whole time axis
            assert dropped or kept, (b, c)

    print("KERNEL_OK")
</pallas_src>

<mosaic_0001>
module attributes {stable_mosaic.version = 11 : i64} {
  func.func @_locked_dropout_kernel(%arg0: i32, %arg1: i32, %arg2: memref<2xi32, #tpu.memory_space<smem>>, %arg3: memref<1x8x128xf32, #tpu.memory_space<vmem>>, %arg4: memref<1x1x128xf32, #tpu.memory_space<vmem>>, %arg5: memref<1x8x128xf32, #tpu.memory_space<vmem>>) attributes {dimension_semantics = [#tpu.dimension_semantics<parallel>, #tpu.dimension_semantics<parallel>], iteration_bounds = array<i64: 2, 2>, scalar_prefetch = 1 : i64, scratch_operands = 0 : i64, tpu.core_type = #tpu.core_type<tc>, window_params = [{transform_indices = @transform_0, window_bounds = array<i64: 1, 8, 128>}, {transform_indices = @transform_1, window_bounds = array<i64: 1, 1, 128>}, {transform_indices = @transform_2, window_bounds = array<i64: 1, 8, 128>}]} {
    %0 = tpu.iota {dimensions = array<i32: 0>} : vector<8x128xi32>
    %c8_i32 = arith.constant 8 : i32
    %1 = arith.muli %arg1, %c8_i32 : i32
    %2 = vector.broadcast %1 : i32 to vector<8x128xi32>
    %3 = arith.addi %0, %2 : vector<8x128xi32>
    %4 = arith.index_cast %arg0 : i32 to index
    %5 = memref.load %arg2[%4] : memref<2xi32, #tpu.memory_space<smem>>
    %6 = vector.broadcast %5 : i32 to vector<8x128xi32>
    %7 = arith.cmpi slt, %3, %6 : vector<8x128xi32>
    %c0 = arith.constant 0 : index
    %c0_0 = arith.constant 0 : index
    %c0_1 = arith.constant 0 : index
    %8 = vector.load %arg3[%c0, %c0_0, %c0_1] : memref<1x8x128xf32, #tpu.memory_space<vmem>>, vector<1x8x128xf32>
    %9 = vector.shape_cast %8 : vector<1x8x128xf32> to vector<8x128xf32>
    %c0_2 = arith.constant 0 : index
    %c0_3 = arith.constant 0 : index
    %c0_4 = arith.constant 0 : index
    %10 = vector.load %arg4[%c0_2, %c0_3, %c0_4] : memref<1x1x128xf32, #tpu.memory_space<vmem>>, vector<1x1x128xf32>
    %11 = vector.shape_cast %10 : vector<1x1x128xf32> to vector<1x128xf32>
    %12 = vector.broadcast %11 : vector<1x128xf32> to vector<8x128xf32>
    %13 = arith.mulf %9, %12 : vector<8x128xf32>
    %cst = arith.constant 0.000000e+00 : f32
    %14 = vector.broadcast %cst : f32 to vector<8x128xf32>
    %15 = arith.select %7, %13, %14 : vector<8x128xi1>, vector<8x128xf32>
    %c0_5 = arith.constant 0 : index
    %c0_6 = arith.constant 0 : index
    %c0_7 = arith.constant 0 : index
    %16 = vector.load %arg5[%c0_5, %c0_6, %c0_7] : memref<1x8x128xf32, #tpu.memory_space<vmem>>, vector<1x8x128xf32>
    %17 = vector.shape_cast %16 : vector<1x8x128xf32> to vector<8x128xf32>
    %18 = vector.shape_cast %15 : vector<8x128xf32> to vector<1x8x128xf32>
    tpu.vector_store %arg5[%c0_5, %c0_6, %c0_7], %18 {strides = array<i32>} : memref<1x8x128xf32, #tpu.memory_space<vmem>>, vector<1x8x128xf32>,
    return
  }
  func.func @transform_0(%arg0: i32, %arg1: i32, %arg2: memref<2xi32, #tpu.memory_space<smem>>) -> (i32, i32, i32) {
    %c0_i32 = arith.constant 0 : i32
    %c0_i32_0 = arith.constant 0 : i32
    return %arg0, %arg1, %c0_i32 : i32, i32, i32
  }
  func.func @transform_1(%arg0: i32, %arg1: i32, %arg2: memref<2xi32, #tpu.memory_space<smem>>) -> (i32, i32, i32) {
    %c0_i32 = arith.constant 0 : i32
    %c0_i32_0 = arith.constant 0 : i32
    %c0_i32_1 = arith.constant 0 : i32
    return %arg0, %c0_i32, %c0_i32_0 : i32, i32, i32
  }
  func.func @transform_2(%arg0: i32, %arg1: i32, %arg2: memref<2xi32, #tpu.memory_space<smem>>) -> (i32, i32, i32) {
    %c0_i32 = arith.constant 0 : i32
    %c0_i32_0 = arith.constant 0 : i32
    return %arg0, %arg1, %c0_i32 : i32, i32, i32
  }
}

</mosaic_0001>

<llo_original>
// kernel: locked_dropout.1
$region0: #{locked_dropout.1}
  #allocation0 [shape = 'u32[]', space=smem, size = 0x4, offset = 0x4, fixed_abs, tag = 'smem constant byte address 0x4 - core index']
  #allocation1 [shape = 'u32[144,128]{1,0:T(1,128)}', space=vmem, size = 0x12000, scoped, tag = 'internal scratch']
  #allocation2 [shape = 's32[1]{0}', space=sflag, size = 0x4, scoped, tag = 'scoped memory for locked_dropout.1']
  #allocation3 [shape = 'u8[512]{0}', space=smem, size = 0x200, scoped, tag = 'prefetched SMEM operand 0']
  %s0 = inlined_call_operand.vmem [shape: s32[2], index: 0, kind: input, shape index: {}]
  %s1 = inlined_call_operand.vmem [shape: f32[2,16,128], index: 1, kind: input, shape index: {}]
  %s2 = inlined_call_operand.vmem [shape: f32[2,1,128], index: 2, kind: input, shape index: {}]
  %s3 = inlined_call_operand.hbm [shape: f32[2,16,128], index: 3, kind: output, shape index: {}]
  %s4 = sld [smem:[#allocation0]]
  $region41: #{locked_dropout.1} parent=0
    _
  %s6 = ssub.s32 1, %s4
  %s7 = scalar_select 0, %s6, %s4
  %s8 = sshll.u32 %s0, 4
  %s9 = int_to_ptr.vmem [resolvable:$true] %s8
  %11 = dma.vmem_to_smem %s9, 16, [#allocation3], [#allocation2]
  %12 = dma.done [#allocation2], 16
  %13 = sfence
  $region1: #{locked_dropout.1} parent=0
    #allocation4 [shape = 'u8[8192]{0}', space=vmem, size = 0x2000, scoped, tag = 'output window, operand 0']
    #allocation5 [shape = 's32[2]{0}', space=sflag, size = 0x8, scoped, tag = 'scoped memory for locked_dropout.1']
    %14 = vsyncpa [#allocation5], 0
    %s15 = scalar_lea.sflag [#allocation5], 1
    %16 = vsyncpa %s15, 0
    loop: start=0, step=1, limit=6
    $region2: #{locked_dropout.1} parent=1 // loop_pre_header
      _
    $region3: #{locked_dropout.1} parent=1 // loop_header
      %s18 = sphi 0, %s22
      %p19 = scmp.ge.s32.totalorder %s18, 6
      %s25 = sphi 0, %s37
      %s26 = sphi 0, %s33
      %s27 = sphi 0, %s25
      %s28 = sphi 0, %s26
      %s29 = sphi 0, %s27
      %s30 = sphi 0, %s28
      %s42 = sphi 0, %s44
      %s45 = sphi 0, %s42
      %s46 = sphi 0, %s45
      %s62 = sphi 0, %s46
      %s68 = sphi 0, %s70
      %s71 = sphi 0, %s68
      %s72 = sphi 0, %s71
      %s88 = sphi 0, %s72
      %s96 = sphi 0, %s98
      %s99 = sphi 0, %s96
      %s100 = sphi 0, %s99
      %s116 = sphi 0, %s100
    $region4: #{locked_dropout.1} parent=1 // loop_header_branch
      %21 = sbr.rel (%p19) target = $region8
    $region5: #{locked_dropout.1} parent=1 // loop_body
      %s23 = ssub.s32 %s18, 1
      %s24 = ssub.s32 %s18, 2
      %s31 = sadd.s32 1, %s26
      %p32 = scmp.ge.s32.totalorder %s31, 2
      %s33 = scalar_select %p32, 0, %s31
      %s34 = sadd.s32 1, %s25
      %s35 = scalar_select %p32, %s34, %s25
      %p36 = scmp.ge.s32.totalorder %s35, 2
      %s37 = scalar_select %p36, 0, %s35
      %s38 = ssub.s32 %s25, %s37
      %s39 = ssub.s32 %s26, %s33
      %s40 = sor.u32 %s38, %s39
      %p41 = scmp.eq.s32.totalorder %s40, 0
      %s43 = sadd.s32 %s42, 1
      %s44 = scalar_select %p41, %s42, %s43
      %p47 = pneg %p41
      %p48 = scmp.eq.s32.totalorder %s18, 3
      %p49 = por %p47, %p48
      %p50 = scmp.ne.s32.totalorder %s42, %s45
      %p51 = scmp.eq.s32.totalorder %s18, 0
      %p52 = por %p50, %p51
      %p53 = scmp.ne.s32.totalorder %s42, %s45
      %p54 = scmp.eq.s32.totalorder %s23, 3
      %p55 = por %p53, %p54
      %p56 = scmp.ne.s32.totalorder %s45, %s46
      %p57 = scmp.eq.s32.totalorder %s23, 0
      %p58 = por %p56, %p57
      %p59 = scmp.ne.s32.totalorder %s45, %s46
      %p60 = scmp.eq.s32.totalorder %s24, 3
      %p61 = por %p59, %p60
      %p63 = scmp.ne.s32.totalorder %s46, %s62
      %p64 = scmp.eq.s32.totalorder %s24, 0
      %p65 = por %p63, %p64
      %s66 = ssub.s32 %s25, %s37
      %p67 = scmp.eq.s32.totalorder %s66, 0
      %s69 = sadd.s32 %s68, 1
      %s70 = scalar_select %p67, %s68, %s69
      %p73 = pneg %p67
      %p74 = scmp.eq.s32.totalorder %s18, 3
      %p75 = por %p73, %p74
      %p76 = scmp.ne.s32.totalorder %s68, %s71
      %p77 = scmp.eq.s32.totalorder %s18, 0
      %p78 = por %p76, %p77
      %p79 = scmp.ne.s32.totalorder %s68, %s71
      %p80 = scmp.eq.s32.totalorder %s23, 3
      %p81 = por %p79, %p80
      %p82 = scmp.ne.s32.totalorder %s71, %s72
      %p83 = scmp.eq.s32.totalorder %s23, 0
      %p84 = por %p82, %p83
      %p85 = scmp.ne.s32.totalorder %s71, %s72
      %p86 = scmp.eq.s32.totalorder %s24, 3
      %p87 = por %p85, %p86
      %p89 = scmp.ne.s32.totalorder %s72, %s88
      %p90 = scmp.eq.s32.totalorder %s24, 0
      %p91 = por %p89, %p90
      %s92 = ssub.s32 %s25, %s37
      %s93 = ssub.s32 %s26, %s33
      %s94 = sor.u32 %s92, %s93
      %p95 = scmp.eq.s32.totalorder %s94, 0
      %s97 = sadd.s32 %s96, 1
      %s98 = scalar_select %p95, %s96, %s97
      %p101 = pneg %p95
      %p102 = scmp.eq.s32.totalorder %s18, 3
      %p103 = por %p101, %p102
      %p104 = scmp.ne.s32.totalorder %s96, %s99
      %p105 = scmp.eq.s32.totalorder %s18, 0
      %p106 = por %p104, %p105
      %p107 = scmp.ne.s32.totalorder %s96, %s99
      %p108 = scmp.eq.s32.totalorder %s23, 3
      %p109 = por %p107, %p108
      %p110 = scmp.ne.s32.totalorder %s99, %s100
      %p111 = scmp.eq.s32.totalorder %s23, 0
      %p112 = por %p110, %p111
      %p113 = scmp.ne.s32.totalorder %s99, %s100
      %p114 = scmp.eq.s32.totalorder %s24, 3
      %p115 = por %p113, %p114
      %p117 = scmp.ne.s32.totalorder %s100, %s116
      %p118 = scmp.eq.s32.totalorder %s24, 0
      %p119 = por %p117, %p118
      %p120 = scmp.le.s32.totalorder 1, %s18
      %p121 = scmp.lt.s32.totalorder %s18, 5
      %p122 = pnand %p120, %p121
      %p123 = pneg %p122
      // Predicated region
      $region9: #{locked_dropout.1} parent=5 // pred_check
        _
      $region10: #{locked_dropout.1} parent=5 // pred_check_branch
        %125 = sbr.rel (%p122) target = $region12
      $region11: #{locked_dropout.1} parent=5 // pred_region
        %s126 = ssub.s32 %s18, 1
      $region12: #{locked_dropout.1} parent=5 // pred_fallthru
        _
      %p127 = scmp.lt.s32.totalorder %s18, 4
      // Predicated region
      $region13: #{locked_dropout.1} parent=5 // pred_check
        %p128 = pneg %p127
      $region14: #{locked_dropout.1} parent=5 // pred_check_branch
        %130 = sbr.rel (%p128) target = $region16
      $region15: #{locked_dropout.1} parent=5 // pred_region
        // Predicated region
        $region17: #{locked_dropout.1} parent=15 // pred_check
          %p131 = pneg %p52
        $region18: #{locked_dropout.1} parent=15 // pred_check_branch
          %133 = sbr.rel (%p131) target = $region20
        $region19: #{locked_dropout.1} parent=15 // pred_region
          %p134 = scmp.lt.s32.totalorder %s25, 1
          %s135 = scalar_select %p134, %s25, 1
          %p136 = scmp.lt.s32.totalorder %s26, 1
          %s137 = scalar_select %p136, %s26, 1
          %s138 = smul.addr %s135, 2
          %s139 = sadd.s32 %s137, %s138
          %s140 = smul.addr %s139, 8
          %s141 = scalar_lea.vmem %s1, %s140
        $region20: #{locked_dropout.1} parent=15 // pred_fallthru
          _
        // Predicated region
        $region21: #{locked_dropout.1} parent=15 // pred_check
          %p142 = pneg %p78
        $region22: #{locked_dropout.1} parent=15 // pred_check_branch
          %144 = sbr.rel (%p142) target = $region24
        $region23: #{locked_dropout.1} parent=15 // pred_region
          %p145 = scmp.lt.s32.totalorder %s25, 1
          %s146 = scalar_select %p145, %s25, 1
          %s147 = scalar_lea.vmem %s2, %s146
        $region24: #{locked_dropout.1} parent=15 // pred_fallthru
          _
      $region16: #{locked_dropout.1} parent=5 // pred_fallthru
        _
      %p148 = scmp.le.s32.totalorder 1, %s18
      %p149 = scmp.lt.s32.totalorder %s18, 5
      %p150 = pnand %p148, %p149
      %p151 = pneg %p150
      // Predicated region
      $region25: #{locked_dropout.1} parent=5 // pred_check
        _
      $region26: #{locked_dropout.1} parent=5 // pred_check_branch
        %153 = sbr.rel (%p150) target = $region28
      $region27: #{locked_dropout.1} parent=5 // pred_region
        %s154 = ssub.s32 %s18, 1
        %p155 = scmp.lt.s32.totalorder %s27, 1
        %s156 = scalar_select %p155, %s27, 1
        %p157 = scmp.lt.s32.totalorder %s28, 1
        %s158 = scalar_select %p157, %s28, 1
        %s159 = smul.addr %s156, 2
        %s160 = sadd.s32 %s158, %s159
        %s161 = smul.addr %s160, 8
        %s162 = scalar_lea.vmem %s1, %s161
        %p163 = pneg %p58
        %p164 = pneg %p55
        %p165 = scmp.lt.s32.totalorder %s27, 1
        %s166 = scalar_select %p165, %s27, 1
        %s167 = scalar_lea.vmem %s2, %s166
        %p168 = pneg %p84
        %p169 = pneg %p81
        %p170 = pneg %p112
        %p171 = pneg %p109
        %s172 = sand.u32 %s99, 1
        %s173 = scalar_lea.sflag [#allocation5], %s172
        %s174 = sand.u32 %s99, 1
        %s175 = smul.addr %s174, 8
        %s176 = scalar_lea.vmem [#allocation4], %s175
        %p177 = scmp.lt.s32.totalorder %s27, 1
        %s178 = scalar_select %p177, %s27, 1
        %p179 = scmp.lt.s32.totalorder %s28, 1
        %s180 = scalar_select %p179, %s28, 1
        %s181 = smul.addr %s178, 2
        %s182 = sadd.s32 %s180, %s181
        %s183 = smul.addr %s182, 8
        %s184 = scalar_lea.vmem %s1, %s183
        %p185 = scmp.lt.s32.totalorder %s27, 1
        %s186 = scalar_select %p185, %s27, 1
        %s187 = scalar_lea.vmem %s2, %s186
        %v188 = vlaneseq
        %v189 = vshrl.u32 %v188, 7
        %s190 = smul.u32 %s28, 8
        %v191 = vstv %s190
        %v192 = vadd.s32 %v189, %v191
        %s193 = sld [smem:[#allocation3 + %s27]]
        %v194 = vstv %s193
        %vm195 = vcmp.lt.s32.totalorder %v192, %v194
        %v196 = vld [vmem:[%s184] sm:$0xff]
        %v197 = vld [vmem:[%s187] sm:$0x1]
        %v199 = vlaneseq
        %v200 = vshrl.u32 %v199, 7
        %v201 = vsub.s32 0, %v200
        %v202 = vrot.slane %v197, %v201
        %v204 = vmul.f32 %v196, %v202
        %v205 = vsel %vm195, %v204, 0.0
        %206 = vst [vmem:[%s176] sm:$0xff] %v205
        %s207 = sand.u32 %s99, 1
        %s208 = scalar_lea.sflag [#allocation5], %s207
        %s209 = sand.u32 %s99, 1
        %s210 = smul.addr %s209, 8
        %s211 = scalar_lea.vmem [#allocation4], %s210
        // Predicated region
        $region29: #{locked_dropout.1} parent=27 // pred_check
          %p212 = pneg %p109
        $region30: #{locked_dropout.1} parent=27 // pred_check_branch
          %214 = sbr.rel (%p212) target = $region32
        $region31: #{locked_dropout.1} parent=27 // pred_region
          %s216 = ssub.s32 128, 128
          %217 = vsyncadd %s208, %s216
          %s218 = smul.addr %s27, 2
          %s219 = sadd.s32 %s28, %s218
          %s220 = smul.addr %s219, 128
          %s221 = scalar_lea.hbm %s3, %s220
          %s223 = sshll.u32 %s211, 4
          %s224 = int_to_ptr.vmem [resolvable:$true] %s223
          %226 = dma.vmem_to_hbm [thread:$0]  %s224, 128, %s221, %s208
        $region32: #{locked_dropout.1} parent=27 // pred_fallthru
          _
      $region28: #{locked_dropout.1} parent=5 // pred_fallthru
        _
      %p227 = scmp.le.s32.totalorder 2, %s18
      // Predicated region
      $region33: #{locked_dropout.1} parent=5 // pred_check
        %p228 = pneg %p227
      $region34: #{locked_dropout.1} parent=5 // pred_check_branch
        %230 = sbr.rel (%p228) target = $region36
      $region35: #{locked_dropout.1} parent=5 // pred_region
        %s231 = ssub.s32 %s18, 2
        // Predicated region
        $region37: #{locked_dropout.1} parent=35 // pred_check
          %p232 = pneg %p115
        $region38: #{locked_dropout.1} parent=35 // pred_check_branch
          %234 = sbr.rel (%p232) target = $region40
        $region39: #{locked_dropout.1} parent=35 // pred_region
          %s235 = sand.u32 %s100, 1
          %s236 = scalar_lea.sflag [#allocation5], %s235
          %s237 = sand.u32 %s100, 1
          %s238 = smul.addr %s237, 8
          %s239 = scalar_lea.vmem [#allocation4], %s238
          %240 = dma.done %s236, 128
        $region40: #{locked_dropout.1} parent=35 // pred_fallthru
          _
      $region36: #{locked_dropout.1} parent=5 // pred_fallthru
        _
    $region6: #{locked_dropout.1} parent=1 // loop_footer
      %s22 = sadd.s32 1, %s18
    $region7: #{locked_dropout.1} parent=1 // loop_footer_branch
      %17 = sbr.rel target = $region3
    $region8: #{locked_dropout.1} parent=1 // loop_exit
      _
    %241 = vsyncpa [#allocation5], 1
    %s242 = scalar_lea.sflag [#allocation5], 1
    %243 = vsyncpa %s242, 1

</llo_original>
